<compile_context>
chip_gen: v5e
topology: v5e:2x2
jax: 0.10.0
libtpu: 0.0.40
codegen_flags: <defaults>
</compile_context>

<pallas_src>
import jax
import jax.numpy as jnp
from jax.experimental import pallas as pl
from jax.experimental.pallas import tpu as pltpu

LIN_FTRS = [10, 10, 10, 10, 10, 8]
BN_EPS = 1e-5
TB_DEFAULT = 16384                 # batch tile (lanes); >= ~0.75 MB HBM per step
VMEM_LIMIT_BYTES = 32 * 1024 * 1024


def _round_up(x, m):
    return ((x + m - 1) // m) * m


def make_tabular_kernel(n_layers):
    """Whole MLP chain in one kernel: bf16 dot -> bias -> ReLU per layer,
    final per-feature affine (last layer's folded BN) at the end."""

    def kernel(*refs):
        x_ref = refs[0]            # (in_f, TB)  bf16
        o_ref = refs[-1]           # (out_dim, TB) bf16
        p = refs[1:-1]             # [W0] + (n_layers-1)*[W'_l, b'_l] + [scale, shift]

        # Layer 0: Linear (no bias) -> ReLU.  Its BN affine is folded into layer 1.
        h = jnp.maximum(
            jnp.dot(p[0][...], x_ref[...], preferred_element_type=jnp.float32),
            0.0)                                                   # (n0, TB) f32
        idx = 1
        for _ in range(1, n_layers):
            w_ref, b_ref = p[idx], p[idx + 1]
            idx += 2
            z = jnp.dot(w_ref[...], h.astype(jnp.bfloat16),        # bf16 x bf16 MXU
                        preferred_element_type=jnp.float32)
            h = jnp.maximum(z + b_ref[...], 0.0)                   # bias + ReLU, f32
        s_ref, t_ref = p[idx], p[idx + 1]                          # last layer's affine
        o_ref[...] = (h * s_ref[...] + t_ref[...]).astype(o_ref.dtype)
        # Dropout: identity at inference.

    return kernel


def _fold_params(params):
    """Fold eval-mode BN into per-feature affines, then fold each layer's
    affine forward into the next layer's weight/bias.  Returns the flat
    parameter list fed to the kernel plus its HBM byte count."""
    Ws, scales, shifts = [], [], []
    for w, g, b, m, v in params:
        scale = (g * jax.lax.rsqrt(v + BN_EPS)).astype(jnp.float32)
        shift = (b - m * scale).astype(jnp.float32)
        Ws.append(w.astype(jnp.float32))
        scales.append(scale)
        shifts.append(shift)

    flat = [Ws[0].astype(jnp.bfloat16)]                       # layer 0: W only
    for l in range(1, len(params)):
        w_fold = (Ws[l] * scales[l - 1][None, :]).astype(jnp.bfloat16)  # W·diag(s)
        b_fold = (Ws[l] @ shifts[l - 1]).astype(jnp.float32)            # W·shift
        flat.append(w_fold)
        flat.append(b_fold.reshape(-1, 1))
    flat.append(scales[-1].reshape(-1, 1))                    # last layer's affine
    flat.append(shifts[-1].reshape(-1, 1))

    param_bytes = sum(int(a.size) * a.dtype.itemsize for a in flat)
    return flat, param_bytes


def tabular_forward_t(xT, params, *, tile_batch=None):
    """Primary (layout-friendly) entry point.

    xT:     (in_features, batch) bf16 activations (feature-major).
    params: list of (W (out,in) f32, gamma, beta, run_mean, run_var) per layer.
    Returns (out_dim, batch) bf16.
    """
    n_layers = len(params)
    in_f, batch = xT.shape
    out_dim = params[-1][0].shape[0]

    flat, param_bytes = _fold_params(params)

    # --- Batch tile on the 128-lane axis -------------------------------------
    pad128 = _round_up(batch, 128)
    if tile_batch is None:
        tile_batch = min(TB_DEFAULT, pad128)
        # v7x: keep >= 2 grid steps when the batch is big enough for 2 TCs.
        if pad128 > 128:
            tile_batch = min(tile_batch, _round_up(pl.cdiv(pad128, 2), 128))
    assert tile_batch % 128 == 0, "tile_batch must be a multiple of 128"
    padded = _round_up(batch, tile_batch)

    if padded != batch:
        xT = jnp.pad(xT, ((0, 0), (0, padded - batch)))

    grid = (padded // tile_batch,)

    in_specs = [pl.BlockSpec((in_f, tile_batch), lambda i: (0, i))]
    for arr in flat:
        # Constant block index -> parameters stay VMEM-resident across tiles.
        in_specs.append(pl.BlockSpec(arr.shape, lambda i: (0, 0)))
    out_specs = pl.BlockSpec((out_dim, tile_batch), lambda i: (0, i))

    flops = 2 * padded * sum(int(w.shape[0]) * int(w.shape[1])
                             for w, _, _, _, _ in params)
    bytes_accessed = in_f * padded * 2 + param_bytes + out_dim * padded * 2

    oT = pl.pallas_call(
        make_tabular_kernel(n_layers),
        out_shape=jax.ShapeDtypeStruct((out_dim, padded), jnp.bfloat16),
        grid_spec=pltpu.PrefetchScalarGridSpec(
            num_scalar_prefetch=0,
            grid=grid,
            in_specs=in_specs,
            out_specs=out_specs,
        ),
        compiler_params=pltpu.CompilerParams(
            dimension_semantics=("parallel",),
            vmem_limit_bytes=VMEM_LIMIT_BYTES,
        ),
        cost_estimate=pl.CostEstimate(
            flops=flops, transcendentals=0, bytes_accessed=bytes_accessed),
    )(xT, *flat)

    return oT[:, :batch]


def tabular_forward(x, params, *, tile_batch=None):
    """Compatibility shim matching the PyTorch layout: x (batch, in_features)
    f32 -> (batch, out_dim) bf16.  Prefer tabular_forward_t to avoid the
    wrapper transpose/cast passes in a real pipeline."""
    xT = jnp.transpose(x).astype(jnp.bfloat16)
    oT = tabular_forward_t(xT, params, tile_batch=tile_batch)
    return jnp.transpose(oT)


def ref_forward(x, params):
    """Pure-JAX reference of the PyTorch eval-mode forward (unfolded BN, f32
    math) on the same bf16-quantized x / W the kernel sees.  Independently
    checks the affine-forward fold done for the kernel."""
    h = x.astype(jnp.bfloat16).astype(jnp.float32)
    for w, g, b, m, v in params:
        wq = w.astype(jnp.bfloat16).astype(jnp.float32)
        h = h @ wq.T                                         # Linear, bias=False
        h = jnp.maximum(h, 0.0)                              # ReLU
        h = (h - m) * jax.lax.rsqrt(v + BN_EPS) * g + b      # BatchNorm1d (eval)
    return h


def init_params(key, inp_features, lin_ftrs):
    # Layer dims per TabularNet.__init__:
    #   'input'  : inp_features -> lin_ftrs[0]
    #   'hiddenK': lin_ftrs[K]  -> lin_ftrs[K+1]
    dims = [(inp_features, lin_ftrs[0])] + list(zip(lin_ftrs[:-1], lin_ftrs[1:]))
    params = []
    for n_in, n_out in dims:
        key, kw, kg, kb, km, kv = jax.random.split(key, 6)
        bound = 1.0 / float(n_in) ** 0.5
        # PyTorch Linear weight layout: (out, in).
        w = jax.random.uniform(kw, (n_out, n_in), jnp.float32, -bound, bound)
        gamma = jax.random.uniform(kg, (n_out,), jnp.float32, 0.5, 1.5)
        beta = 0.1 * jax.random.normal(kb, (n_out,), jnp.float32)
        run_mean = 0.1 * jax.random.normal(km, (n_out,), jnp.float32)
        run_var = jax.random.uniform(kv, (n_out,), jnp.float32, 0.5, 1.5)
        params.append((w, gamma, beta, run_mean, run_var))
    return params


if __name__ == "__main__":
    batch = 2
    inp_features = 16

    key = jax.random.PRNGKey(0)
    kx, kp = jax.random.split(key)
    x = jax.random.normal(kx, (batch, inp_features), jnp.float32)
    params = init_params(kp, inp_features, LIN_FTRS)

    out = jax.block_until_ready(tabular_forward(x, params))
    expected = ref_forward(x, params)

    assert out.shape == (batch, LIN_FTRS[-1]), out.shape
    assert jnp.allclose(out.astype(jnp.float32), expected, atol=2e-2, rtol=2e-2), (
        out, expected)

    print("KERNEL_OK")
</pallas_src>

<mosaic_0001>
module attributes {stable_mosaic.version = 11 : i64} {
  func.func @kernel(%arg0: i32, %arg1: memref<16x128xbf16, #tpu.memory_space<vmem>>, %arg2: memref<10x16xbf16, #tpu.memory_space<vmem>>, %arg3: memref<10x10xbf16, #tpu.memory_space<vmem>>, %arg4: memref<10x1xf32, #tpu.memory_space<vmem>>, %arg5: memref<10x10xbf16, #tpu.memory_space<vmem>>, %arg6: memref<10x1xf32, #tpu.memory_space<vmem>>, %arg7: memref<10x10xbf16, #tpu.memory_space<vmem>>, %arg8: memref<10x1xf32, #tpu.memory_space<vmem>>, %arg9: memref<10x10xbf16, #tpu.memory_space<vmem>>, %arg10: memref<10x1xf32, #tpu.memory_space<vmem>>, %arg11: memref<8x10xbf16, #tpu.memory_space<vmem>>, %arg12: memref<8x1xf32, #tpu.memory_space<vmem>>, %arg13: memref<8x1xf32, #tpu.memory_space<vmem>>, %arg14: memref<8x1xf32, #tpu.memory_space<vmem>>, %arg15: memref<8x128xbf16, #tpu.memory_space<vmem>>) attributes {dimension_semantics = [#tpu.dimension_semantics<parallel>], iteration_bounds = array<i64: 1>, scalar_prefetch = 0 : i64, scratch_operands = 0 : i64, tpu.core_type = #tpu.core_type<tc>, window_params = [{transform_indices = @transform_0, window_bounds = array<i64: 16, 128>}, {pipeline_mode = #tpu.pipeline_mode<synchronous>, transform_indices = @transform_1, window_bounds = array<i64: 10, 16>}, {pipeline_mode = #tpu.pipeline_mode<synchronous>, transform_indices = @transform_2, window_bounds = array<i64: 10, 10>}, {pipeline_mode = #tpu.pipeline_mode<synchronous>, transform_indices = @transform_3, window_bounds = array<i64: 10, 1>}, {pipeline_mode = #tpu.pipeline_mode<synchronous>, transform_indices = @transform_4, window_bounds = array<i64: 10, 10>}, {pipeline_mode = #tpu.pipeline_mode<synchronous>, transform_indices = @transform_5, window_bounds = array<i64: 10, 1>}, {pipeline_mode = #tpu.pipeline_mode<synchronous>, transform_indices = @transform_6, window_bounds = array<i64: 10, 10>}, {pipeline_mode = #tpu.pipeline_mode<synchronous>, transform_indices = @transform_7, window_bounds = array<i64: 10, 1>}, {pipeline_mode = #tpu.pipeline_mode<synchronous>, transform_indices = @transform_8, window_bounds = array<i64: 10, 10>}, {pipeline_mode = #tpu.pipeline_mode<synchronous>, transform_indices = @transform_9, window_bounds = array<i64: 10, 1>}, {pipeline_mode = #tpu.pipeline_mode<synchronous>, transform_indices = @transform_10, window_bounds = array<i64: 8, 10>}, {pipeline_mode = #tpu.pipeline_mode<synchronous>, transform_indices = @transform_11, window_bounds = array<i64: 8, 1>}, {pipeline_mode = #tpu.pipeline_mode<synchronous>, transform_indices = @transform_12, window_bounds = array<i64: 8, 1>}, {pipeline_mode = #tpu.pipeline_mode<synchronous>, transform_indices = @transform_13, window_bounds = array<i64: 8, 1>}, {transform_indices = @transform_14, window_bounds = array<i64: 8, 128>}]} {
    %c0 = arith.constant 0 : index
    %c0_0 = arith.constant 0 : index
    %0 = vector.load %arg2[%c0, %c0_0] : memref<10x16xbf16, #tpu.memory_space<vmem>>, vector<10x16xbf16>
    %c0_1 = arith.constant 0 : index
    %c0_2 = arith.constant 0 : index
    %1 = vector.load %arg1[%c0_1, %c0_2] : memref<16x128xbf16, #tpu.memory_space<vmem>>, vector<16x128xbf16>
    %cst = arith.constant dense<0.000000e+00> : vector<10x128xf32>
    %2 = tpu.matmul %0, %1, %cst {dimension_numbers = #tpu.dot_dimension_numbers<[1], [0], [0], [1], [0, 0, 1, 1], [], []>} : vector<10x16xbf16>, vector<16x128xbf16>, vector<10x128xf32> -> vector<10x128xf32>
    %cst_3 = arith.constant 0.000000e+00 : f32
    %3 = vector.broadcast %cst_3 : f32 to vector<10x128xf32>
    %4 = arith.maximumf %2, %3 : vector<10x128xf32>
    %c0_4 = arith.constant 0 : index
    %c0_5 = arith.constant 0 : index
    %5 = vector.load %arg3[%c0_4, %c0_5] : memref<10x10xbf16, #tpu.memory_space<vmem>>, vector<10x10xbf16>
    %6 = arith.truncf %4 : vector<10x128xf32> to vector<10x128xbf16>
    %cst_6 = arith.constant dense<0.000000e+00> : vector<10x128xf32>
    %7 = tpu.matmul %5, %6, %cst_6 {dimension_numbers = #tpu.dot_dimension_numbers<[1], [0], [0], [1], [0, 0, 1, 1], [], []>} : vector<10x10xbf16>, vector<10x128xbf16>, vector<10x128xf32> -> vector<10x128xf32>
    %c0_7 = arith.constant 0 : index
    %c0_8 = arith.constant 0 : index
    %8 = vector.load %arg4[%c0_7, %c0_8] : memref<10x1xf32, #tpu.memory_space<vmem>>, vector<10x1xf32>
    %9 = vector.broadcast %8 : vector<10x1xf32> to vector<10x128xf32>
    %10 = arith.addf %7, %9 : vector<10x128xf32>
    %cst_9 = arith.constant 0.000000e+00 : f32
    %11 = vector.broadcast %cst_9 : f32 to vector<10x128xf32>
    %12 = arith.maximumf %10, %11 : vector<10x128xf32>
    %c0_10 = arith.constant 0 : index
    %c0_11 = arith.constant 0 : index
    %13 = vector.load %arg5[%c0_10, %c0_11] : memref<10x10xbf16, #tpu.memory_space<vmem>>, vector<10x10xbf16>
    %14 = arith.truncf %12 : vector<10x128xf32> to vector<10x128xbf16>
    %cst_12 = arith.constant dense<0.000000e+00> : vector<10x128xf32>
    %15 = tpu.matmul %13, %14, %cst_12 {dimension_numbers = #tpu.dot_dimension_numbers<[1], [0], [0], [1], [0, 0, 1, 1], [], []>} : vector<10x10xbf16>, vector<10x128xbf16>, vector<10x128xf32> -> vector<10x128xf32>
    %c0_13 = arith.constant 0 : index
    %c0_14 = arith.constant 0 : index
    %16 = vector.load %arg6[%c0_13, %c0_14] : memref<10x1xf32, #tpu.memory_space<vmem>>, vector<10x1xf32>
    %17 = vector.broadcast %16 : vector<10x1xf32> to vector<10x128xf32>
    %18 = arith.addf %15, %17 : vector<10x128xf32>
    %cst_15 = arith.constant 0.000000e+00 : f32
    %19 = vector.broadcast %cst_15 : f32 to vector<10x128xf32>
    %20 = arith.maximumf %18, %19 : vector<10x128xf32>
    %c0_16 = arith.constant 0 : index
    %c0_17 = arith.constant 0 : index
    %21 = vector.load %arg7[%c0_16, %c0_17] : memref<10x10xbf16, #tpu.memory_space<vmem>>, vector<10x10xbf16>
    %22 = arith.truncf %20 : vector<10x128xf32> to vector<10x128xbf16>
    %cst_18 = arith.constant dense<0.000000e+00> : vector<10x128xf32>
    %23 = tpu.matmul %21, %22, %cst_18 {dimension_numbers = #tpu.dot_dimension_numbers<[1], [0], [0], [1], [0, 0, 1, 1], [], []>} : vector<10x10xbf16>, vector<10x128xbf16>, vector<10x128xf32> -> vector<10x128xf32>
    %c0_19 = arith.constant 0 : index
    %c0_20 = arith.constant 0 : index
    %24 = vector.load %arg8[%c0_19, %c0_20] : memref<10x1xf32, #tpu.memory_space<vmem>>, vector<10x1xf32>
    %25 = vector.broadcast %24 : vector<10x1xf32> to vector<10x128xf32>
    %26 = arith.addf %23, %25 : vector<10x128xf32>
    %cst_21 = arith.constant 0.000000e+00 : f32
    %27 = vector.broadcast %cst_21 : f32 to vector<10x128xf32>
    %28 = arith.maximumf %26, %27 : vector<10x128xf32>
    %c0_22 = arith.constant 0 : index
    %c0_23 = arith.constant 0 : index
    %29 = vector.load %arg9[%c0_22, %c0_23] : memref<10x10xbf16, #tpu.memory_space<vmem>>, vector<10x10xbf16>
    %30 = arith.truncf %28 : vector<10x128xf32> to vector<10x128xbf16>
    %cst_24 = arith.constant dense<0.000000e+00> : vector<10x128xf32>
    %31 = tpu.matmul %29, %30, %cst_24 {dimension_numbers = #tpu.dot_dimension_numbers<[1], [0], [0], [1], [0, 0, 1, 1], [], []>} : vector<10x10xbf16>, vector<10x128xbf16>, vector<10x128xf32> -> vector<10x128xf32>
    %c0_25 = arith.constant 0 : index
    %c0_26 = arith.constant 0 : index
    %32 = vector.load %arg10[%c0_25, %c0_26] : memref<10x1xf32, #tpu.memory_space<vmem>>, vector<10x1xf32>
    %33 = vector.broadcast %32 : vector<10x1xf32> to vector<10x128xf32>
    %34 = arith.addf %31, %33 : vector<10x128xf32>
    %cst_27 = arith.constant 0.000000e+00 : f32
    %35 = vector.broadcast %cst_27 : f32 to vector<10x128xf32>
    %36 = arith.maximumf %34, %35 : vector<10x128xf32>
    %c0_28 = arith.constant 0 : index
    %c0_29 = arith.constant 0 : index
    %37 = vector.load %arg11[%c0_28, %c0_29] : memref<8x10xbf16, #tpu.memory_space<vmem>>, vector<8x10xbf16>
    %38 = arith.truncf %36 : vector<10x128xf32> to vector<10x128xbf16>
    %cst_30 = arith.constant dense<0.000000e+00> : vector<8x128xf32>
    %39 = tpu.matmul %37, %38, %cst_30 {dimension_numbers = #tpu.dot_dimension_numbers<[1], [0], [0], [1], [0, 0, 1, 1], [], []>} : vector<8x10xbf16>, vector<10x128xbf16>, vector<8x128xf32> -> vector<8x128xf32>
    %c0_31 = arith.constant 0 : index
    %c0_32 = arith.constant 0 : index
    %40 = vector.load %arg12[%c0_31, %c0_32] : memref<8x1xf32, #tpu.memory_space<vmem>>, vector<8x1xf32>
    %41 = vector.broadcast %40 : vector<8x1xf32> to vector<8x128xf32>
    %42 = arith.addf %39, %41 : vector<8x128xf32>
    %cst_33 = arith.constant 0.000000e+00 : f32
    %43 = vector.broadcast %cst_33 : f32 to vector<8x128xf32>
    %44 = arith.maximumf %42, %43 : vector<8x128xf32>
    %c0_34 = arith.constant 0 : index
    %c0_35 = arith.constant 0 : index
    %45 = vector.load %arg13[%c0_34, %c0_35] : memref<8x1xf32, #tpu.memory_space<vmem>>, vector<8x1xf32>
    %46 = vector.broadcast %45 : vector<8x1xf32> to vector<8x128xf32>
    %47 = arith.mulf %44, %46 : vector<8x128xf32>
    %c0_36 = arith.constant 0 : index
    %c0_37 = arith.constant 0 : index
    %48 = vector.load %arg14[%c0_36, %c0_37] : memref<8x1xf32, #tpu.memory_space<vmem>>, vector<8x1xf32>
    %49 = vector.broadcast %48 : vector<8x1xf32> to vector<8x128xf32>
    %50 = arith.addf %47, %49 : vector<8x128xf32>
    %51 = arith.truncf %50 : vector<8x128xf32> to vector<8x128xbf16>
    %c0_38 = arith.constant 0 : index
    %c0_39 = arith.constant 0 : index
    %52 = vector.load %arg15[%c0_38, %c0_39] : memref<8x128xbf16, #tpu.memory_space<vmem>>, vector<8x128xbf16>
    tpu.vector_store %arg15[%c0_38, %c0_39], %51 {strides = array<i32>} : memref<8x128xbf16, #tpu.memory_space<vmem>>, vector<8x128xbf16>,
    return
  }
  func.func @transform_0(%arg0: i32) -> (i32, i32) {
    %c0_i32 = arith.constant 0 : i32
    %c0_i32_0 = arith.constant 0 : i32
    return %c0_i32, %arg0 : i32, i32
  }
  func.func @transform_1(%arg0: i32) -> (i32, i32) {
    %c0_i32 = arith.constant 0 : i32
    %c0_i32_0 = arith.constant 0 : i32
    %c0_i32_1 = arith.constant 0 : i32
    return %c0_i32, %c0_i32_0 : i32, i32
  }
  func.func @transform_2(%arg0: i32) -> (i32, i32) {
    %c0_i32 = arith.constant 0 : i32
    %c0_i32_0 = arith.constant 0 : i32
    %c0_i32_1 = arith.constant 0 : i32
    return %c0_i32, %c0_i32_0 : i32, i32
  }
  func.func @transform_3(%arg0: i32) -> (i32, i32) {
    %c0_i32 = arith.constant 0 : i32
    %c0_i32_0 = arith.constant 0 : i32
    %c0_i32_1 = arith.constant 0 : i32
    return %c0_i32, %c0_i32_0 : i32, i32
  }
  func.func @transform_4(%arg0: i32) -> (i32, i32) {
    %c0_i32 = arith.constant 0 : i32
    %c0_i32_0 = arith.constant 0 : i32
    %c0_i32_1 = arith.constant 0 : i32
    return %c0_i32, %c0_i32_0 : i32, i32
  }
  func.func @transform_5(%arg0: i32) -> (i32, i32) {
    %c0_i32 = arith.constant 0 : i32
    %c0_i32_0 = arith.constant 0 : i32
    %c0_i32_1 = arith.constant 0 : i32
    return %c0_i32, %c0_i32_0 : i32, i32
  }
  func.func @transform_6(%arg0: i32) -> (i32, i32) {
    %c0_i32 = arith.constant 0 : i32
    %c0_i32_0 = arith.constant 0 : i32
    %c0_i32_1 = arith.constant 0 : i32
    return %c0_i32, %c0_i32_0 : i32, i32
  }
  func.func @transform_7(%arg0: i32) -> (i32, i32) {
    %c0_i32 = arith.constant 0 : i32
    %c0_i32_0 = arith.constant 0 : i32
    %c0_i32_1 = arith.constant 0 : i32
    return %c0_i32, %c0_i32_0 : i32, i32
  }
  func.func @transform_8(%arg0: i32) -> (i32, i32) {
    %c0_i32 = arith.constant 0 : i32
    %c0_i32_0 = arith.constant 0 : i32
    %c0_i32_1 = arith.constant 0 : i32
    return %c0_i32, %c0_i32_0 : i32, i32
  }
  func.func @transform_9(%arg0: i32) -> (i32, i32) {
    %c0_i32 = arith.constant 0 : i32
    %c0_i32_0 = arith.constant 0 : i32
    %c0_i32_1 = arith.constant 0 : i32
    return %c0_i32, %c0_i32_0 : i32, i32
  }
  func.func @transform_10(%arg0: i32) -> (i32, i32) {
    %c0_i32 = arith.constant 0 : i32
    %c0_i32_0 = arith.constant 0 : i32
    %c0_i32_1 = arith.constant 0 : i32
    return %c0_i32, %c0_i32_0 : i32, i32
  }
  func.func @transform_11(%arg0: i32) -> (i32, i32) {
    %c0_i32 = arith.constant 0 : i32
    %c0_i32_0 = arith.constant 0 : i32
    %c0_i32_1 = arith.constant 0 : i32
    return %c0_i32, %c0_i32_0 : i32, i32
  }
  func.func @transform_12(%arg0: i32) -> (i32, i32) {
    %c0_i32 = arith.constant 0 : i32
    %c0_i32_0 = arith.constant 0 : i32
    %c0_i32_1 = arith.constant 0 : i32
    return %c0_i32, %c0_i32_0 : i32, i32
  }
  func.func @transform_13(%arg0: i32) -> (i32, i32) {
    %c0_i32 = arith.constant 0 : i32
    %c0_i32_0 = arith.constant 0 : i32
    %c0_i32_1 = arith.constant 0 : i32
    return %c0_i32, %c0_i32_0 : i32, i32
  }
  func.func @transform_14(%arg0: i32) -> (i32, i32) {
    %c0_i32 = arith.constant 0 : i32
    %c0_i32_0 = arith.constant 0 : i32
    return %c0_i32, %arg0 : i32, i32
  }
}

</mosaic_0001>

<llo_original>
// kernel: tpu_custom_call.1
$region0: #{tpu_custom_call.1}
  #allocation0 [shape = 'u32[]', space=smem, size = 0x4, offset = 0x4, fixed_abs, tag = 'smem constant byte address 0x4 - core index']
  #allocation1 [shape = 'u32[72,128]{1,0:T(1,128)}', space=vmem, size = 0x9000, scoped, tag = 'internal scratch']
  %s0 = inlined_call_operand.vmem [shape: bf16[16,128], index: 0, kind: input, shape index: {}]
  %s1 = inlined_call_operand.vmem [shape: bf16[10,16], index: 1, kind: input, shape index: {}]
  %s2 = inlined_call_operand.vmem [shape: bf16[10,10], index: 2, kind: input, shape index: {}]
  %s3 = inlined_call_operand.vmem [shape: f32[10,1], index: 3, kind: input, shape index: {}]
  %s4 = inlined_call_operand.vmem [shape: bf16[10,10], index: 4, kind: input, shape index: {}]
  %s5 = inlined_call_operand.vmem [shape: f32[10,1], index: 5, kind: input, shape index: {}]
  %s6 = inlined_call_operand.vmem [shape: bf16[10,10], index: 6, kind: input, shape index: {}]
  %s7 = inlined_call_operand.vmem [shape: f32[10,1], index: 7, kind: input, shape index: {}]
  %s8 = inlined_call_operand.vmem [shape: bf16[10,10], index: 8, kind: input, shape index: {}]
  %s9 = inlined_call_operand.vmem [shape: f32[10,1], index: 9, kind: input, shape index: {}]
  %s10 = inlined_call_operand.vmem [shape: bf16[8,10], index: 10, kind: input, shape index: {}]
  %s11 = inlined_call_operand.vmem [shape: f32[8,1], index: 11, kind: input, shape index: {}]
  %s12 = inlined_call_operand.vmem [shape: f32[8,1], index: 12, kind: input, shape index: {}]
  %s13 = inlined_call_operand.vmem [shape: f32[8,1], index: 13, kind: input, shape index: {}]
  %s14 = inlined_call_operand.hbm [shape: bf16[8,128], index: 14, kind: output, shape index: {}]
  %s15 = sld [smem:[#allocation0]]
  $region66: #{tpu_custom_call.1} parent=0
    _
  %s17 = ssub.s32 1, %s15
  %s18 = scalar_select 0, %s17, %s15
  $region1: #{tpu_custom_call.1} parent=0
    #allocation2 [shape = 'u8[2048]{0}', space=vmem, size = 0x800, scoped, tag = 'output window, operand 0, single buffered']
    #allocation3 [shape = 's32[1]{0}', space=sflag, size = 0x4, scoped, tag = 'scoped memory for tpu_custom_call.1']
    %19 = vsyncpa [#allocation3], 0
    // Predicated region
    $region2: #{tpu_custom_call.1} parent=1 // pred_check
      _
    $region3: #{tpu_custom_call.1} parent=1 // pred_check_branch
      %21 = sbr.rel (0) target = $region5
    $region4: #{tpu_custom_call.1} parent=1 // pred_region
      _
    $region5: #{tpu_custom_call.1} parent=1 // pred_fallthru
      _
    // Predicated region
    $region6: #{tpu_custom_call.1} parent=1 // pred_check
      _
    $region7: #{tpu_custom_call.1} parent=1 // pred_check_branch
      %23 = sbr.rel (0) target = $region9
    $region8: #{tpu_custom_call.1} parent=1 // pred_region
      _
    $region9: #{tpu_custom_call.1} parent=1 // pred_fallthru
      _
    // Predicated region
    $region10: #{tpu_custom_call.1} parent=1 // pred_check
      _
    $region11: #{tpu_custom_call.1} parent=1 // pred_check_branch
      %25 = sbr.rel (0) target = $region13
    $region12: #{tpu_custom_call.1} parent=1 // pred_region
      _
    $region13: #{tpu_custom_call.1} parent=1 // pred_fallthru
      _
    // Predicated region
    $region14: #{tpu_custom_call.1} parent=1 // pred_check
      _
    $region15: #{tpu_custom_call.1} parent=1 // pred_check_branch
      %27 = sbr.rel (0) target = $region17
    $region16: #{tpu_custom_call.1} parent=1 // pred_region
      _
    $region17: #{tpu_custom_call.1} parent=1 // pred_fallthru
      _
    // Predicated region
    $region18: #{tpu_custom_call.1} parent=1 // pred_check
      _
    $region19: #{tpu_custom_call.1} parent=1 // pred_check_branch
      %29 = sbr.rel (0) target = $region21
    $region20: #{tpu_custom_call.1} parent=1 // pred_region
      _
    $region21: #{tpu_custom_call.1} parent=1 // pred_fallthru
      _
    // Predicated region
    $region22: #{tpu_custom_call.1} parent=1 // pred_check
      _
    $region23: #{tpu_custom_call.1} parent=1 // pred_check_branch
      %31 = sbr.rel (0) target = $region25
    $region24: #{tpu_custom_call.1} parent=1 // pred_region
      _
    $region25: #{tpu_custom_call.1} parent=1 // pred_fallthru
      _
    // Predicated region
    $region26: #{tpu_custom_call.1} parent=1 // pred_check
      _
    $region27: #{tpu_custom_call.1} parent=1 // pred_check_branch
      %33 = sbr.rel (0) target = $region29
    $region28: #{tpu_custom_call.1} parent=1 // pred_region
      _
    $region29: #{tpu_custom_call.1} parent=1 // pred_fallthru
      _
    // Predicated region
    $region30: #{tpu_custom_call.1} parent=1 // pred_check
      _
    $region31: #{tpu_custom_call.1} parent=1 // pred_check_branch
      %35 = sbr.rel (0) target = $region33
    $region32: #{tpu_custom_call.1} parent=1 // pred_region
      _
    $region33: #{tpu_custom_call.1} parent=1 // pred_fallthru
      _
    // Predicated region
    $region34: #{tpu_custom_call.1} parent=1 // pred_check
      _
    $region35: #{tpu_custom_call.1} parent=1 // pred_check_branch
      %37 = sbr.rel (0) target = $region37
    $region36: #{tpu_custom_call.1} parent=1 // pred_region
      _
    $region37: #{tpu_custom_call.1} parent=1 // pred_fallthru
      _
    // Predicated region
    $region38: #{tpu_custom_call.1} parent=1 // pred_check
      _
    $region39: #{tpu_custom_call.1} parent=1 // pred_check_branch
      %39 = sbr.rel (0) target = $region41
    $region40: #{tpu_custom_call.1} parent=1 // pred_region
      _
    $region41: #{tpu_custom_call.1} parent=1 // pred_fallthru
      _
    // Predicated region
    $region42: #{tpu_custom_call.1} parent=1 // pred_check
      _
    $region43: #{tpu_custom_call.1} parent=1 // pred_check_branch
      %41 = sbr.rel (0) target = $region45
    $region44: #{tpu_custom_call.1} parent=1 // pred_region
      _
    $region45: #{tpu_custom_call.1} parent=1 // pred_fallthru
      _
    // Predicated region
    $region46: #{tpu_custom_call.1} parent=1 // pred_check
      _
    $region47: #{tpu_custom_call.1} parent=1 // pred_check_branch
      %43 = sbr.rel (0) target = $region49
    $region48: #{tpu_custom_call.1} parent=1 // pred_region
      _
    $region49: #{tpu_custom_call.1} parent=1 // pred_fallthru
      _
    // Predicated region
    $region50: #{tpu_custom_call.1} parent=1 // pred_check
      _
    $region51: #{tpu_custom_call.1} parent=1 // pred_check_branch
      %45 = sbr.rel (0) target = $region53
    $region52: #{tpu_custom_call.1} parent=1 // pred_region
      _
    $region53: #{tpu_custom_call.1} parent=1 // pred_fallthru
      _
    // Predicated region
    $region54: #{tpu_custom_call.1} parent=1 // pred_check
      _
    $region55: #{tpu_custom_call.1} parent=1 // pred_check_branch
      %47 = sbr.rel (0) target = $region57
    $region56: #{tpu_custom_call.1} parent=1 // pred_region
      _
    $region57: #{tpu_custom_call.1} parent=1 // pred_fallthru
      _
    %v49 = vld [vmem:[%s1] sm:$0xf]
    %v50 = vld [vmem:[%s1 + $0x4] sm:$0x1]
    %v51 = vld [vmem:[%s0] sm:$0xf]
    %v52 = vld [vmem:[%s0 + $0x4] sm:$0xf]
    %v55 = vunpack.c.l.b16 %v49
    %v56 = vunpack.c.l.b16 %v50
    %v57 = vpack.c.b16 %v56, %v55
    %v60 = vunpack.c.l.b16 %v51
    %v61 = vunpack.c.l.b16 %v52
    %v62 = vpack.c.b16 %v61, %v60
    %vm64 = vcmask 130048
    %v66 = vsel %vm64, %v57, 0
    %68 = vmatpush.bf16.msra.mxu0 0
    %69 = vmatpush.bf16.msra.mxu0 0
    %70 = vmatpush.bf16.msra.mxu0 0
    %71 = vmatpush.bf16.msra.mxu0 0
    %72 = vmatpush.bf16.msra.mxu0 0
    %73 = vmatpush.bf16.msra.mxu0 0
    %74 = vmatpush.bf16.msra.mxu0 0
    %75 = vmatpush.bf16.msra.mxu0 %v62
    %76 = vmatmul.bf16.gmra.mxu0 %v66
    %v77 = vpop.f32.mrf.mxu0
    %v78 = vadd.f32 0.0, %v77
    %v79 = vpop.f32.mrf.mxu0
    %v80 = vadd.f32 0.0, %v79
    %81 = vdwg.mxu0
    %v82 = vmax.f32 %v78, 0.0
    %v83 = vmax.f32 %v80, 0.0
    %v84 = vld [vmem:[%s2] sm:$0xf]
    %v85 = vld [vmem:[%s2 + $0x4] sm:$0x1]
    %v86 = vpack.c.bf16 %v83, %v82
    %v87 = vld [vmem:[%s3] sm:$0xff]
    %v88 = vld [vmem:[%s3 + $0x8] sm:$0x3]
    %90 = vset.pattern.permute.xlu0 0
    %91 = vperm.xlu0 %90, %v87
    %v92 = vpop.permute.xlu0 %91
    %95 = vset.pattern.permute.xlu0 0
    %96 = vperm.xlu0 %95, %v88
    %v97 = vpop.permute.xlu0 %96
    %v101 = vunpack.c.l.b16 %v84
    %v102 = vunpack.c.l.b16 %v85
    %v103 = vpack.c.b16 %v102, %v101
    %vm104 = vcmask 80896
    %v106 = vsel %vm104, %v103, 0
    %vm108 = vcmask 1044480
    %v110 = vsel %vm108, %v86, 0
    %112 = vmatpush.bf16.msra.mxu0 0
    %113 = vmatpush.bf16.msra.mxu0 0
    %114 = vmatpush.bf16.msra.mxu0 0
    %115 = vmatpush.bf16.msra.mxu0 0
    %116 = vmatpush.bf16.msra.mxu0 0
    %117 = vmatpush.bf16.msra.mxu0 0
    %118 = vmatpush.bf16.msra.mxu0 0
    %119 = vmatpush.bf16.msra.mxu0 %v110
    %120 = vmatmul.bf16.gmra.mxu0 %v106
    %v121 = vpop.f32.mrf.mxu0
    %v122 = vadd.f32 %v92, %v121
    %v123 = vpop.f32.mrf.mxu0
    %v124 = vadd.f32 %v97, %v123
    %125 = vdwg.mxu0
    %v126 = vmax.f32 %v122, 0.0
    %v127 = vmax.f32 %v124, 0.0
    %v128 = vld [vmem:[%s4] sm:$0xf]
    %v129 = vld [vmem:[%s4 + $0x4] sm:$0x1]
    %v130 = vpack.c.bf16 %v127, %v126
    %v131 = vld [vmem:[%s5] sm:$0xff]
    %v132 = vld [vmem:[%s5 + $0x8] sm:$0x3]
    %134 = vset.pattern.permute.xlu0 0
    %135 = vperm.xlu0 %134, %v131
    %v136 = vpop.permute.xlu0 %135
    %139 = vset.pattern.permute.xlu0 0
    %140 = vperm.xlu0 %139, %v132
    %v141 = vpop.permute.xlu0 %140
    %v145 = vunpack.c.l.b16 %v128
    %v146 = vunpack.c.l.b16 %v129
    %v147 = vpack.c.b16 %v146, %v145
    %v149 = vsel %vm104, %v147, 0
    %v152 = vsel %vm108, %v130, 0
    %154 = vmatpush.bf16.msra.mxu0 0
    %155 = vmatpush.bf16.msra.mxu0 0
    %156 = vmatpush.bf16.msra.mxu0 0
    %157 = vmatpush.bf16.msra.mxu0 0
    %158 = vmatpush.bf16.msra.mxu0 0
    %159 = vmatpush.bf16.msra.mxu0 0
    %160 = vmatpush.bf16.msra.mxu0 0
    %161 = vmatpush.bf16.msra.mxu0 %v152
    %162 = vmatmul.bf16.gmra.mxu0 %v149
    %v163 = vpop.f32.mrf.mxu0
    %v164 = vadd.f32 %v136, %v163
    %v165 = vpop.f32.mrf.mxu0
    %v166 = vadd.f32 %v141, %v165
    %167 = vdwg.mxu0
    %v168 = vmax.f32 %v164, 0.0
    %v169 = vmax.f32 %v166, 0.0
    %v170 = vld [vmem:[%s6] sm:$0xf]
    %v171 = vld [vmem:[%s6 + $0x4] sm:$0x1]
    %v172 = vpack.c.bf16 %v169, %v168
    %v173 = vld [vmem:[%s7] sm:$0xff]
    %v174 = vld [vmem:[%s7 + $0x8] sm:$0x3]
    %176 = vset.pattern.permute.xlu0 0
    %177 = vperm.xlu0 %176, %v173
    %v178 = vpop.permute.xlu0 %177
    %181 = vset.pattern.permute.xlu0 0
    %182 = vperm.xlu0 %181, %v174
    %v183 = vpop.permute.xlu0 %182
    %v187 = vunpack.c.l.b16 %v170
    %v188 = vunpack.c.l.b16 %v171
    %v189 = vpack.c.b16 %v188, %v187
    %v191 = vsel %vm104, %v189, 0
    %v194 = vsel %vm108, %v172, 0
    %196 = vmatpush.bf16.msra.mxu0 0
    %197 = vmatpush.bf16.msra.mxu0 0
    %198 = vmatpush.bf16.msra.mxu0 0
    %199 = vmatpush.bf16.msra.mxu0 0
    %200 = vmatpush.bf16.msra.mxu0 0
    %201 = vmatpush.bf16.msra.mxu0 0
    %202 = vmatpush.bf16.msra.mxu0 0
    %203 = vmatpush.bf16.msra.mxu0 %v194
    %204 = vmatmul.bf16.gmra.mxu0 %v191
    %v205 = vpop.f32.mrf.mxu0
    %v206 = vadd.f32 %v178, %v205
    %v207 = vpop.f32.mrf.mxu0
    %v208 = vadd.f32 %v183, %v207
    %209 = vdwg.mxu0
    %v210 = vmax.f32 %v206, 0.0
    %v211 = vmax.f32 %v208, 0.0
    %v212 = vld [vmem:[%s8] sm:$0xf]
    %v213 = vld [vmem:[%s8 + $0x4] sm:$0x1]
    %v214 = vpack.c.bf16 %v211, %v210
    %v215 = vld [vmem:[%s9] sm:$0xff]
    %v216 = vld [vmem:[%s9 + $0x8] sm:$0x3]
    %218 = vset.pattern.permute.xlu0 0
    %219 = vperm.xlu0 %218, %v215
    %v220 = vpop.permute.xlu0 %219
    %223 = vset.pattern.permute.xlu0 0
    %224 = vperm.xlu0 %223, %v216
    %v225 = vpop.permute.xlu0 %224
    %v229 = vunpack.c.l.b16 %v212
    %v230 = vunpack.c.l.b16 %v213
    %v231 = vpack.c.b16 %v230, %v229
    %v233 = vsel %vm104, %v231, 0
    %v236 = vsel %vm108, %v214, 0
    %238 = vmatpush.bf16.msra.mxu0 0
    %239 = vmatpush.bf16.msra.mxu0 0
    %240 = vmatpush.bf16.msra.mxu0 0
    %241 = vmatpush.bf16.msra.mxu0 0
    %242 = vmatpush.bf16.msra.mxu0 0
    %243 = vmatpush.bf16.msra.mxu0 0
    %244 = vmatpush.bf16.msra.mxu0 0
    %245 = vmatpush.bf16.msra.mxu0 %v236
    %246 = vmatmul.bf16.gmra.mxu0 %v233
    %v247 = vpop.f32.mrf.mxu0
    %v248 = vadd.f32 %v220, %v247
    %v249 = vpop.f32.mrf.mxu0
    %v250 = vadd.f32 %v225, %v249
    %251 = vdwg.mxu0
    %v252 = vmax.f32 %v248, 0.0
    %v253 = vmax.f32 %v250, 0.0
    %v254 = vld [vmem:[%s10] sm:$0xf]
    %v255 = vpack.c.bf16 %v253, %v252
    %v256 = vld [vmem:[%s11] sm:$0xff]
    %258 = vset.pattern.permute.xlu0 0
    %259 = vperm.xlu0 %258, %v256
    %v260 = vpop.permute.xlu0 %259
    %v263 = vsel %vm104, %v254, 0
    %v266 = vsel %vm108, %v255, 0
    %268 = vmatpush.bf16.msra.mxu0 0
    %269 = vmatpush.bf16.msra.mxu0 0
    %270 = vmatpush.bf16.msra.mxu0 0
    %271 = vmatpush.bf16.msra.mxu0 0
    %272 = vmatpush.bf16.msra.mxu0 0
    %273 = vmatpush.bf16.msra.mxu0 0
    %274 = vmatpush.bf16.msra.mxu0 0
    %275 = vmatpush.bf16.msra.mxu0 %v266
    %276 = vmatmul.bf16.gmra.mxu0 %v263
    %v277 = vpop.f32.mrf.mxu0
    %v278 = vadd.f32 %v260, %v277
    %v279 = vpop.f32.mrf.mxu0
    %280 = vdwg.mxu0
    %v281 = vmax.f32 %v278, 0.0
    %v282 = vld [vmem:[%s12] sm:$0xff]
    %284 = vset.pattern.permute.xlu0 0
    %285 = vperm.xlu0 %284, %v282
    %v286 = vpop.permute.xlu0 %285
    %v288 = vmul.f32 %v281, %v286
    %v289 = vld [vmem:[%s13] sm:$0xff]
    %291 = vset.pattern.permute.xlu0 0
    %292 = vperm.xlu0 %291, %v289
    %v293 = vpop.permute.xlu0 %292
    %v295 = vadd.f32 %v288, %v293
    %v296 = vpack.c.bf16 %v295, %v295
    %297 = vst [vmem:[#allocation2] sm:$0xf] %v296
    // Predicated region
    $region58: #{tpu_custom_call.1} parent=1 // pred_check
      _
    $region59: #{tpu_custom_call.1} parent=1 // pred_check_branch
      %299 = sbr.rel (0) target = $region61
    $region60: #{tpu_custom_call.1} parent=1 // pred_region
      %301 = vsyncadd [#allocation3], 0
      %s303 = sshll.u32 [#allocation2], 4
      %s304 = int_to_ptr.vmem [resolvable:$true] %s303
      %s305 = sshll.u32 %s14, 4
      %s306 = int_to_ptr.hbm [resolvable:$true] %s305
      %308 = dma.vmem_to_hbm [thread:$0]  %s304, 64, %s306, [#allocation3]
    $region61: #{tpu_custom_call.1} parent=1 // pred_fallthru
      _
    // Predicated region
    $region62: #{tpu_custom_call.1} parent=1 // pred_check
      _
    $region63: #{tpu_custom_call.1} parent=1 // pred_check_branch
      %310 = sbr.rel (0) target = $region65
    $region64: #{tpu_custom_call.1} parent=1 // pred_region
      %312 = dma.done [#allocation3], 64
    $region65: #{tpu_custom_call.1} parent=1 // pred_fallthru
      _
    %313 = vsyncpa [#allocation3], 1

</llo_original>
